<compile_context>
chip_gen: v5e
topology: v5e:2x2
jax: 0.10.0
libtpu: 0.0.40
codegen_flags: <defaults>
</compile_context>

<pallas_src>
import functools

import jax
import jax.numpy as jnp
from jax import lax
from jax.experimental import pallas as pl
from jax.experimental.pallas import tpu as pltpu


def _round_up(n, m):
    return ((n + m - 1) // m) * m


# ----------------------------- Pallas kernel -------------------------------


def _softplus(z):
    # numerically stable softplus; log(1+x) with x<=1 is accurate to well
    # below the 1e-3 tolerance (error only where the term is itself ~1e-8).
    return jnp.maximum(z, 0.0) + jnp.log(1.0 + jnp.exp(-jnp.abs(z)))


def _swish(z):
    # sigmoid(z) = 0.5*(tanh(z/2) + 1): one EUP transcendental per element
    # (vs exp + reciprocal), and no divide on the VALU.
    return z * (0.5 * jnp.tanh(0.5 * z) + 0.5)


def ensemble_mlp_kernel(
    x_ref,                       # (E, TB, D_in)            f32
    w1_ref, b1_ref,              # (E, D_in, Hp) bf16, (E, 1, Hp) f32
    w2_ref, b2_ref,              # (E, Hp, Hp)  bf16, (E, 1, Hp) f32
    w3_ref, b3_ref,
    w4_ref, b4_ref,
    w5t_ref, b5t_ref,            # (E, out_dim, Hp) bf16, (E, out_dim, 1) f32
    maxlv_ref, minlv_ref,        # (out_dim, 1) f32  (logvar clamps, transposed)
    out_ref,                     # (E, out_dim, TB) f32: rows [:half]=mean, [half:]=var
):
    E = x_ref.shape[0]
    tb = x_ref.shape[1]
    out_dim = out_ref.shape[1]
    out_half = out_dim // 2

    # loop-invariant values hoisted out of the ensemble loop
    max_lv = maxlv_ref[...]                                   # (out_dim, 1)
    min_lv = minlv_ref[...]
    row = lax.broadcasted_iota(jnp.int32, (out_dim, tb), 0)
    is_mean = row < out_half                                  # (out_dim, TB)

    # scf.for over ensemble members: bounds vreg live ranges to one member's
    # intermediates (a static unroll lets the scheduler interleave all five
    # members' (TB, Hp) f32 temporaries and spill at large TB).
    @pl.loop(0, E)
    def _(e):
        h = x_ref[e].astype(jnp.bfloat16)                     # (TB, D_in)
        for w_ref, b_ref in ((w1_ref, b1_ref), (w2_ref, b2_ref),
                             (w3_ref, b3_ref), (w4_ref, b4_ref)):
            z = jnp.dot(h, w_ref[e], preferred_element_type=jnp.float32)
            z = z + b_ref[e]                                  # (TB,Hp) + (1,Hp)
            h = _swish(z).astype(jnp.bfloat16)

        # Final layer computed directly in (out_dim, TB) orientation with an
        # NT matmul (contract last dims) -> the member store below is a
        # single lane-dense slab; no in-kernel transpose required.
        z5 = lax.dot_general(w5t_ref[e], h, (((1,), (1,)), ((), ())),
                             preferred_element_type=jnp.float32)
        z5 = z5 + b5t_ref[e]                                  # (out_dim,TB)+(out_dim,1)

        # logvar soft-clamp + exp applied full-width; mean rows are selected
        # away by `is_mean`, so there is one full-width store per member.
        logvar = max_lv - _softplus(max_lv - z5)
        logvar = min_lv + _softplus(logvar - min_lv)
        var = jnp.exp(logvar)
        out_ref[e] = jnp.where(is_mean, z5, var).astype(out_ref.dtype)


# --------------------------- one-time param prep ----------------------------


def _pad_axis(a, axis, new_size):
    pad = [(0, 0)] * a.ndim
    pad[axis] = (0, new_size - a.shape[axis])
    return jnp.pad(a, pad)


def prepare_params(params):
    """One-time parameter massaging (NOT per forward call):
      * bf16 cast of weights for the MXU (f32 accumulation in-kernel),
      * zero-pad hidden 200 -> 256 so every hidden vreg is lane-dense
        (exact: swish(0)=0, padded rows/cols contribute nothing),
      * biases reshaped to (E,1,Hp), layer-5 weight/bias stored transposed,
      * logvar clamps tiled to the fused [mean|var] width and transposed.
    Re-run this only when the underlying parameters change (train step)."""
    hidden = params["b1"].shape[-1]
    hp = _round_up(hidden, 128)
    d_in = params["w1"].shape[1]
    out_dim = params["w5"].shape[-1]

    prepped = {}
    # hidden layers 1..4
    prepped["w1"] = _pad_axis(params["w1"], 2, hp).astype(jnp.bfloat16)
    for i in (2, 3, 4):
        prepped[f"w{i}"] = _pad_axis(_pad_axis(params[f"w{i}"], 1, hp), 2, hp
                                     ).astype(jnp.bfloat16)
    for i in (1, 2, 3, 4):
        prepped[f"b{i}"] = _pad_axis(params[f"b{i}"], 1, hp
                                     )[:, None, :].astype(jnp.float32)
    # layer 5 stored transposed: (E, out_dim, Hp) / (E, out_dim, 1)
    prepped["w5t"] = jnp.swapaxes(_pad_axis(params["w5"], 1, hp), 1, 2
                                  ).astype(jnp.bfloat16)
    prepped["b5t"] = params["b5"][:, :, None].astype(jnp.float32)
    # clamps tiled to full fused width, transposed to (out_dim, 1)
    prepped["max_logvar_t"] = jnp.tile(params["max_logvar"], (1, 2)).T.astype(jnp.float32)
    prepped["min_logvar_t"] = jnp.tile(params["min_logvar"], (1, 2)).T.astype(jnp.float32)
    assert prepped["max_logvar_t"].shape == (out_dim, 1)
    assert prepped["w1"].shape == (params["w1"].shape[0], d_in, hp)
    return prepped


# ------------------------------ JAX wrapper --------------------------------


def ensemble_model_forward(x, prepped, *, batch_tile=512):
    """Pallas-accelerated EnsembleModel.forward (return_log_var=False)."""
    E, B, d_in = x.shape
    hp = prepped["w1"].shape[-1]
    out_dim = prepped["w5t"].shape[1]
    out_half = out_dim // 2

    # --- batch tiling ------------------------------------------------------
    # Pad B to a multiple of 8 (never rely on ragged-tile semantics).  For
    # B >= 256 use >= 2 tiles, each a multiple of 128, so the transposed
    # (out_dim, TB) stores are unmasked and both v7x TensorCores get a
    # "parallel" tile.
    B_pad = _round_up(B, 8)
    if B_pad < 256:
        tb = B_pad                                   # single tile (latency-bound regime)
    else:
        batch_tile = max(128, _round_up(batch_tile, 128))
        tb = min(batch_tile, _round_up(pl.cdiv(B_pad, 2), 128))
        B_pad = _round_up(B_pad, tb)
    grid = (B_pad // tb,)

    if B_pad != B:
        x = jnp.pad(x, ((0, 0), (0, B_pad - B), (0, 0)))

    # --- specs --------------------------------------------------------------
    def full_spec(arr):
        if arr.ndim == 3:
            return pl.BlockSpec(arr.shape, lambda i: (0, 0, 0))
        return pl.BlockSpec(arr.shape, lambda i: (0, 0))

    in_specs = [
        pl.BlockSpec((E, tb, d_in), lambda i: (0, i, 0)),     # x: tiled over batch
        full_spec(prepped["w1"]), full_spec(prepped["b1"]),
        full_spec(prepped["w2"]), full_spec(prepped["b2"]),
        full_spec(prepped["w3"]), full_spec(prepped["b3"]),
        full_spec(prepped["w4"]), full_spec(prepped["b4"]),
        full_spec(prepped["w5t"]), full_spec(prepped["b5t"]),
        full_spec(prepped["max_logvar_t"]), full_spec(prepped["min_logvar_t"]),
    ]
    out_specs = pl.BlockSpec((E, out_dim, tb), lambda i: (0, 0, i))
    out_shape = jax.ShapeDtypeStruct((E, out_dim, B_pad), jnp.float32)

    # --- advisory cost estimate so XLA can schedule around the call ---------
    flops = 2 * E * B_pad * (d_in * hp + 3 * hp * hp + hp * out_dim)
    transcendentals = E * B_pad * (4 * hp + 3 * out_half)
    bytes_accessed = (E * B_pad * (d_in + out_dim) * 4                # x + out
                      + E * (d_in * hp + 3 * hp * hp + out_dim * hp) * 2  # bf16 weights
                      + E * (4 * hp + out_dim) * 4)                   # f32 biases

    fused = pl.pallas_call(
        ensemble_mlp_kernel,
        out_shape=out_shape,
        grid_spec=pltpu.PrefetchScalarGridSpec(
            num_scalar_prefetch=0,
            grid=grid,
            in_specs=in_specs,
            out_specs=out_specs,
        ),
        compiler_params=pltpu.CompilerParams(
            dimension_semantics=("parallel",),       # batch tiles are independent
            vmem_limit_bytes=48 * 1024 * 1024,       # headroom for large tiles (<= v7x 64 MiB)
        ),
        cost_estimate=pl.CostEstimate(
            flops=flops,
            transcendentals=transcendentals,
            bytes_accessed=bytes_accessed,
        ),
    )(
        x,
        prepped["w1"], prepped["b1"],
        prepped["w2"], prepped["b2"],
        prepped["w3"], prepped["b3"],
        prepped["w4"], prepped["b4"],
        prepped["w5t"], prepped["b5t"],
        prepped["max_logvar_t"], prepped["min_logvar_t"],
    )

    mean = jnp.swapaxes(fused[:, :out_half, :B], 1, 2)        # (E, B, out_half)
    var = jnp.swapaxes(fused[:, out_half:, :B], 1, 2)
    return mean, var


# --------------------------- parameter creation -----------------------------


def init_params(key, state_dim, action_dim, ensemble_size, hidden=200):
    """Init mirroring the torch module: truncated-normal weights, zero biases."""
    output_dim = (state_dim + 1) * 2
    in_dim = state_dim + action_dim
    dims = [(in_dim, hidden), (hidden, hidden), (hidden, hidden),
            (hidden, hidden), (hidden, output_dim)]

    params = {}
    keys = jax.random.split(key, len(dims))
    for i, (k, (din, dout)) in enumerate(zip(keys, dims), start=1):
        std = 1.0 / (2.0 * jnp.sqrt(float(din)))
        params[f"w{i}"] = std * jax.random.truncated_normal(
            k, -2.0, 2.0, (ensemble_size, din, dout), dtype=jnp.float32)
        params[f"b{i}"] = jnp.zeros((ensemble_size, dout), dtype=jnp.float32)

    params["max_logvar"] = jnp.ones((1, output_dim // 2), dtype=jnp.float32) / 2.0
    params["min_logvar"] = -jnp.ones((1, output_dim // 2), dtype=jnp.float32) * 10.0
    return params


# ------------------------- pure-JAX reference check --------------------------


def reference_forward(x, params):
    """Reference with the SAME bf16 weight/activation quantization as the
    kernel (f32 accumulation), so the comparison isolates kernel correctness."""
    bf = lambda a: a.astype(jnp.bfloat16)

    h = x
    for i in range(1, 5):
        z = jnp.einsum("ebi,eio->ebo", bf(h), bf(params[f"w{i}"]),
                       preferred_element_type=jnp.float32)
        z = z + params[f"b{i}"][:, None, :]
        h = z * jax.nn.sigmoid(z)

    ret = jnp.einsum("ebi,eio->ebo", bf(h), bf(params["w5"]),
                     preferred_element_type=jnp.float32) + params["b5"][:, None, :]

    out_half = params["max_logvar"].shape[-1]
    mean = ret[:, :, :out_half]
    raw = ret[:, :, out_half:]
    max_lv, min_lv = params["max_logvar"], params["min_logvar"]
    logvar = max_lv - jax.nn.softplus(max_lv - raw)
    logvar = min_lv + jax.nn.softplus(logvar - min_lv)
    return mean, jnp.exp(logvar)


# ----------------------------------- main ------------------------------------


if __name__ == "__main__":
    key = jax.random.PRNGKey(0)

    state_dim = 3
    action_dim = 1
    ensemble_size = 5

    pkey, xkey = jax.random.split(key)
    params = init_params(pkey, state_dim, action_dim, ensemble_size)
    prepped = prepare_params(params)   # one-time: NOT repeated per forward call

    def run_check(batch, batch_tile=512):
        x = jax.random.normal(
            jax.random.fold_in(xkey, batch),
            (ensemble_size, batch, state_dim + action_dim), dtype=jnp.float32)
        mean, var = jax.block_until_ready(
            ensemble_model_forward(x, prepped, batch_tile=batch_tile))
        ref_mean, ref_var = reference_forward(x, params)
        assert mean.shape == ref_mean.shape and var.shape == ref_var.shape
        assert jnp.allclose(mean, ref_mean, rtol=1e-3, atol=1e-3), f"mean mismatch (B={batch})"
        assert jnp.allclose(var, ref_var, rtol=1e-3, atol=1e-3), f"var mismatch (B={batch})"

    run_check(8)     # tiny batch: single tile, grid=(1,)
    run_check(13)    # ragged batch: padded to 16 in the wrapper
    run_check(512)   # two 256-row "parallel" tiles, lane-dense output stores

    # TODO(synk): loss()/train() (Adam step) are not part of forward and are
    # not implemented as Pallas kernels.
    print("KERNEL_OK")
</pallas_src>

<mosaic_0001>
module attributes {stable_mosaic.version = 11 : i64} {
  func.func @ensemble_mlp_kernel(%arg0: i32, %arg1: memref<5x8x4xf32, #tpu.memory_space<vmem>>, %arg2: memref<5x4x256xbf16, #tpu.memory_space<vmem>>, %arg3: memref<5x1x256xf32, #tpu.memory_space<vmem>>, %arg4: memref<5x256x256xbf16, #tpu.memory_space<vmem>>, %arg5: memref<5x1x256xf32, #tpu.memory_space<vmem>>, %arg6: memref<5x256x256xbf16, #tpu.memory_space<vmem>>, %arg7: memref<5x1x256xf32, #tpu.memory_space<vmem>>, %arg8: memref<5x256x256xbf16, #tpu.memory_space<vmem>>, %arg9: memref<5x1x256xf32, #tpu.memory_space<vmem>>, %arg10: memref<5x8x256xbf16, #tpu.memory_space<vmem>>, %arg11: memref<5x8x1xf32, #tpu.memory_space<vmem>>, %arg12: memref<8x1xf32, #tpu.memory_space<vmem>>, %arg13: memref<8x1xf32, #tpu.memory_space<vmem>>, %arg14: memref<5x8x8xf32, #tpu.memory_space<vmem>>) attributes {dimension_semantics = [#tpu.dimension_semantics<parallel>], iteration_bounds = array<i64: 1>, scalar_prefetch = 0 : i64, scratch_operands = 0 : i64, tpu.core_type = #tpu.core_type<tc>, window_params = [{transform_indices = @transform_0, window_bounds = array<i64: 5, 8, 4>}, {pipeline_mode = #tpu.pipeline_mode<synchronous>, transform_indices = @transform_1, window_bounds = array<i64: 5, 4, 256>}, {pipeline_mode = #tpu.pipeline_mode<synchronous>, transform_indices = @transform_2, window_bounds = array<i64: 5, 1, 256>}, {pipeline_mode = #tpu.pipeline_mode<synchronous>, transform_indices = @transform_3, window_bounds = array<i64: 5, 256, 256>}, {pipeline_mode = #tpu.pipeline_mode<synchronous>, transform_indices = @transform_4, window_bounds = array<i64: 5, 1, 256>}, {pipeline_mode = #tpu.pipeline_mode<synchronous>, transform_indices = @transform_5, window_bounds = array<i64: 5, 256, 256>}, {pipeline_mode = #tpu.pipeline_mode<synchronous>, transform_indices = @transform_6, window_bounds = array<i64: 5, 1, 256>}, {pipeline_mode = #tpu.pipeline_mode<synchronous>, transform_indices = @transform_7, window_bounds = array<i64: 5, 256, 256>}, {pipeline_mode = #tpu.pipeline_mode<synchronous>, transform_indices = @transform_8, window_bounds = array<i64: 5, 1, 256>}, {pipeline_mode = #tpu.pipeline_mode<synchronous>, transform_indices = @transform_9, window_bounds = array<i64: 5, 8, 256>}, {pipeline_mode = #tpu.pipeline_mode<synchronous>, transform_indices = @transform_10, window_bounds = array<i64: 5, 8, 1>}, {pipeline_mode = #tpu.pipeline_mode<synchronous>, transform_indices = @transform_11, window_bounds = array<i64: 8, 1>}, {pipeline_mode = #tpu.pipeline_mode<synchronous>, transform_indices = @transform_12, window_bounds = array<i64: 8, 1>}, {transform_indices = @transform_13, window_bounds = array<i64: 5, 8, 8>}]} {
    %c0 = arith.constant 0 : index
    %c0_0 = arith.constant 0 : index
    %0 = vector.load %arg12[%c0, %c0_0] : memref<8x1xf32, #tpu.memory_space<vmem>>, vector<8x1xf32>
    %c0_1 = arith.constant 0 : index
    %c0_2 = arith.constant 0 : index
    %1 = vector.load %arg13[%c0_1, %c0_2] : memref<8x1xf32, #tpu.memory_space<vmem>>, vector<8x1xf32>
    %2 = tpu.iota {dimensions = array<i32: 0>} : vector<8x8xi32>
    %c4_i32 = arith.constant 4 : i32
    %3 = vector.broadcast %c4_i32 : i32 to vector<8x8xi32>
    %4 = arith.cmpi slt, %2, %3 : vector<8x8xi32>
    %c0_i32 = arith.constant 0 : i32
    %c5_i32 = arith.constant 5 : i32
    %5 = arith.addi %c0_i32, %c5_i32 : i32
    %c1_i32 = arith.constant 1 : i32
    scf.for %arg15 = %c0_i32 to %5 step %c1_i32  : i32 {
      %c1_i32_4 = arith.constant 1 : i32
      %6 = arith.muli %arg15, %c1_i32_4 : i32
      %c0_i32_5 = arith.constant 0 : i32
      %7 = arith.addi %c0_i32_5, %6 : i32
      %8 = arith.index_cast %7 : i32 to index
      %c0_6 = arith.constant 0 : index
      %c0_7 = arith.constant 0 : index
      %9 = vector.load %arg1[%8, %c0_6, %c0_7] : memref<5x8x4xf32, #tpu.memory_space<vmem>>, vector<1x8x4xf32>
      %10 = vector.shape_cast %9 : vector<1x8x4xf32> to vector<8x4xf32>
      %11 = arith.truncf %10 : vector<8x4xf32> to vector<8x4xbf16>
      %12 = arith.index_cast %7 : i32 to index
      %c0_8 = arith.constant 0 : index
      %c0_9 = arith.constant 0 : index
      %13 = vector.load %arg2[%12, %c0_8, %c0_9] : memref<5x4x256xbf16, #tpu.memory_space<vmem>>, vector<1x4x256xbf16>
      %14 = vector.shape_cast %13 : vector<1x4x256xbf16> to vector<4x256xbf16>
      %cst = arith.constant dense<0.000000e+00> : vector<8x256xf32>
      %15 = tpu.matmul %11, %14, %cst {dimension_numbers = #tpu.dot_dimension_numbers<[1], [0], [0], [1], [0, 0, 1, 1], [], []>} : vector<8x4xbf16>, vector<4x256xbf16>, vector<8x256xf32> -> vector<8x256xf32>
      %16 = arith.index_cast %7 : i32 to index
      %c0_10 = arith.constant 0 : index
      %c0_11 = arith.constant 0 : index
      %17 = vector.load %arg3[%16, %c0_10, %c0_11] : memref<5x1x256xf32, #tpu.memory_space<vmem>>, vector<1x1x256xf32>
      %18 = vector.shape_cast %17 : vector<1x1x256xf32> to vector<1x256xf32>
      %19 = vector.broadcast %18 : vector<1x256xf32> to vector<8x256xf32>
      %20 = arith.addf %15, %19 : vector<8x256xf32>
      %cst_12 = arith.constant 5.000000e-01 : f32
      %21 = vector.broadcast %cst_12 : f32 to vector<8x256xf32>
      %22 = arith.mulf %21, %20 : vector<8x256xf32>
      %23 = math.tanh %22 : vector<8x256xf32>
      %cst_13 = arith.constant 5.000000e-01 : f32
      %24 = vector.broadcast %cst_13 : f32 to vector<8x256xf32>
      %25 = arith.mulf %24, %23 : vector<8x256xf32>
      %cst_14 = arith.constant 5.000000e-01 : f32
      %26 = vector.broadcast %cst_14 : f32 to vector<8x256xf32>
      %27 = arith.addf %25, %26 : vector<8x256xf32>
      %28 = arith.mulf %20, %27 : vector<8x256xf32>
      %29 = arith.truncf %28 : vector<8x256xf32> to vector<8x256xbf16>
      %30 = arith.index_cast %7 : i32 to index
      %c0_15 = arith.constant 0 : index
      %c0_16 = arith.constant 0 : index
      %31 = vector.load %arg4[%30, %c0_15, %c0_16] : memref<5x256x256xbf16, #tpu.memory_space<vmem>>, vector<1x256x256xbf16>
      %32 = vector.shape_cast %31 : vector<1x256x256xbf16> to vector<256x256xbf16>
      %cst_17 = arith.constant dense<0.000000e+00> : vector<8x256xf32>
      %33 = tpu.matmul %29, %32, %cst_17 {dimension_numbers = #tpu.dot_dimension_numbers<[1], [0], [0], [1], [0, 0, 1, 1], [], []>} : vector<8x256xbf16>, vector<256x256xbf16>, vector<8x256xf32> -> vector<8x256xf32>
      %34 = arith.index_cast %7 : i32 to index
      %c0_18 = arith.constant 0 : index
      %c0_19 = arith.constant 0 : index
      %35 = vector.load %arg5[%34, %c0_18, %c0_19] : memref<5x1x256xf32, #tpu.memory_space<vmem>>, vector<1x1x256xf32>
      %36 = vector.shape_cast %35 : vector<1x1x256xf32> to vector<1x256xf32>
      %37 = vector.broadcast %36 : vector<1x256xf32> to vector<8x256xf32>
      %38 = arith.addf %33, %37 : vector<8x256xf32>
      %cst_20 = arith.constant 5.000000e-01 : f32
      %39 = vector.broadcast %cst_20 : f32 to vector<8x256xf32>
      %40 = arith.mulf %39, %38 : vector<8x256xf32>
      %41 = math.tanh %40 : vector<8x256xf32>
      %cst_21 = arith.constant 5.000000e-01 : f32
      %42 = vector.broadcast %cst_21 : f32 to vector<8x256xf32>
      %43 = arith.mulf %42, %41 : vector<8x256xf32>
      %cst_22 = arith.constant 5.000000e-01 : f32
      %44 = vector.broadcast %cst_22 : f32 to vector<8x256xf32>
      %45 = arith.addf %43, %44 : vector<8x256xf32>
      %46 = arith.mulf %38, %45 : vector<8x256xf32>
      %47 = arith.truncf %46 : vector<8x256xf32> to vector<8x256xbf16>
      %48 = arith.index_cast %7 : i32 to index
      %c0_23 = arith.constant 0 : index
      %c0_24 = arith.constant 0 : index
      %49 = vector.load %arg6[%48, %c0_23, %c0_24] : memref<5x256x256xbf16, #tpu.memory_space<vmem>>, vector<1x256x256xbf16>
      %50 = vector.shape_cast %49 : vector<1x256x256xbf16> to vector<256x256xbf16>
      %cst_25 = arith.constant dense<0.000000e+00> : vector<8x256xf32>
      %51 = tpu.matmul %47, %50, %cst_25 {dimension_numbers = #tpu.dot_dimension_numbers<[1], [0], [0], [1], [0, 0, 1, 1], [], []>} : vector<8x256xbf16>, vector<256x256xbf16>, vector<8x256xf32> -> vector<8x256xf32>
      %52 = arith.index_cast %7 : i32 to index
      %c0_26 = arith.constant 0 : index
      %c0_27 = arith.constant 0 : index
      %53 = vector.load %arg7[%52, %c0_26, %c0_27] : memref<5x1x256xf32, #tpu.memory_space<vmem>>, vector<1x1x256xf32>
      %54 = vector.shape_cast %53 : vector<1x1x256xf32> to vector<1x256xf32>
      %55 = vector.broadcast %54 : vector<1x256xf32> to vector<8x256xf32>
      %56 = arith.addf %51, %55 : vector<8x256xf32>
      %cst_28 = arith.constant 5.000000e-01 : f32
      %57 = vector.broadcast %cst_28 : f32 to vector<8x256xf32>
      %58 = arith.mulf %57, %56 : vector<8x256xf32>
      %59 = math.tanh %58 : vector<8x256xf32>
      %cst_29 = arith.constant 5.000000e-01 : f32
      %60 = vector.broadcast %cst_29 : f32 to vector<8x256xf32>
      %61 = arith.mulf %60, %59 : vector<8x256xf32>
      %cst_30 = arith.constant 5.000000e-01 : f32
      %62 = vector.broadcast %cst_30 : f32 to vector<8x256xf32>
      %63 = arith.addf %61, %62 : vector<8x256xf32>
      %64 = arith.mulf %56, %63 : vector<8x256xf32>
      %65 = arith.truncf %64 : vector<8x256xf32> to vector<8x256xbf16>
      %66 = arith.index_cast %7 : i32 to index
      %c0_31 = arith.constant 0 : index
      %c0_32 = arith.constant 0 : index
      %67 = vector.load %arg8[%66, %c0_31, %c0_32] : memref<5x256x256xbf16, #tpu.memory_space<vmem>>, vector<1x256x256xbf16>
      %68 = vector.shape_cast %67 : vector<1x256x256xbf16> to vector<256x256xbf16>
      %cst_33 = arith.constant dense<0.000000e+00> : vector<8x256xf32>
      %69 = tpu.matmul %65, %68, %cst_33 {dimension_numbers = #tpu.dot_dimension_numbers<[1], [0], [0], [1], [0, 0, 1, 1], [], []>} : vector<8x256xbf16>, vector<256x256xbf16>, vector<8x256xf32> -> vector<8x256xf32>
      %70 = arith.index_cast %7 : i32 to index
      %c0_34 = arith.constant 0 : index
      %c0_35 = arith.constant 0 : index
      %71 = vector.load %arg9[%70, %c0_34, %c0_35] : memref<5x1x256xf32, #tpu.memory_space<vmem>>, vector<1x1x256xf32>
      %72 = vector.shape_cast %71 : vector<1x1x256xf32> to vector<1x256xf32>
      %73 = vector.broadcast %72 : vector<1x256xf32> to vector<8x256xf32>
      %74 = arith.addf %69, %73 : vector<8x256xf32>
      %cst_36 = arith.constant 5.000000e-01 : f32
      %75 = vector.broadcast %cst_36 : f32 to vector<8x256xf32>
      %76 = arith.mulf %75, %74 : vector<8x256xf32>
      %77 = math.tanh %76 : vector<8x256xf32>
      %cst_37 = arith.constant 5.000000e-01 : f32
      %78 = vector.broadcast %cst_37 : f32 to vector<8x256xf32>
      %79 = arith.mulf %78, %77 : vector<8x256xf32>
      %cst_38 = arith.constant 5.000000e-01 : f32
      %80 = vector.broadcast %cst_38 : f32 to vector<8x256xf32>
      %81 = arith.addf %79, %80 : vector<8x256xf32>
      %82 = arith.mulf %74, %81 : vector<8x256xf32>
      %83 = arith.truncf %82 : vector<8x256xf32> to vector<8x256xbf16>
      %84 = arith.index_cast %7 : i32 to index
      %c0_39 = arith.constant 0 : index
      %c0_40 = arith.constant 0 : index
      %85 = vector.load %arg10[%84, %c0_39, %c0_40] : memref<5x8x256xbf16, #tpu.memory_space<vmem>>, vector<1x8x256xbf16>
      %86 = vector.shape_cast %85 : vector<1x8x256xbf16> to vector<8x256xbf16>
      %cst_41 = arith.constant dense<0.000000e+00> : vector<8x8xf32>
      %87 = tpu.matmul %86, %83, %cst_41 {dimension_numbers = #tpu.dot_dimension_numbers<[1], [1], [0], [0], [0, 0, 1, 0], [], []>} : vector<8x256xbf16>, vector<8x256xbf16>, vector<8x8xf32> -> vector<8x8xf32>
      %88 = arith.index_cast %7 : i32 to index
      %c0_42 = arith.constant 0 : index
      %c0_43 = arith.constant 0 : index
      %89 = vector.load %arg11[%88, %c0_42, %c0_43] : memref<5x8x1xf32, #tpu.memory_space<vmem>>, vector<1x8x1xf32>
      %90 = vector.shape_cast %89 : vector<1x8x1xf32> to vector<8x1xf32>
      %91 = vector.broadcast %90 : vector<8x1xf32> to vector<8x8xf32>
      %92 = arith.addf %87, %91 : vector<8x8xf32>
      %93 = vector.broadcast %0 : vector<8x1xf32> to vector<8x8xf32>
      %94 = arith.subf %93, %92 : vector<8x8xf32>
      %cst_44 = arith.constant 0.000000e+00 : f32
      %95 = vector.broadcast %cst_44 : f32 to vector<8x8xf32>
      %96 = arith.maximumf %94, %95 : vector<8x8xf32>
      %97 = math.absf %94 : vector<8x8xf32>
      %cst_45 = arith.constant 0.000000e+00 : f32
      %98 = vector.broadcast %cst_45 : f32 to vector<8x8xf32>
      %99 = arith.subf %98, %97 : vector<8x8xf32>
      %100 = math.exp %99 : vector<8x8xf32>
      %cst_46 = arith.constant 1.000000e+00 : f32
      %101 = vector.broadcast %cst_46 : f32 to vector<8x8xf32>
      %102 = arith.addf %101, %100 : vector<8x8xf32>
      %103 = math.log %102 : vector<8x8xf32>
      %104 = arith.addf %96, %103 : vector<8x8xf32>
      %105 = vector.broadcast %0 : vector<8x1xf32> to vector<8x8xf32>
      %106 = arith.subf %105, %104 : vector<8x8xf32>
      %107 = vector.broadcast %1 : vector<8x1xf32> to vector<8x8xf32>
      %108 = arith.subf %106, %107 : vector<8x8xf32>
      %cst_47 = arith.constant 0.000000e+00 : f32
      %109 = vector.broadcast %cst_47 : f32 to vector<8x8xf32>
      %110 = arith.maximumf %108, %109 : vector<8x8xf32>
      %111 = math.absf %108 : vector<8x8xf32>
      %cst_48 = arith.constant 0.000000e+00 : f32
      %112 = vector.broadcast %cst_48 : f32 to vector<8x8xf32>
      %113 = arith.subf %112, %111 : vector<8x8xf32>
      %114 = math.exp %113 : vector<8x8xf32>
      %cst_49 = arith.constant 1.000000e+00 : f32
      %115 = vector.broadcast %cst_49 : f32 to vector<8x8xf32>
      %116 = arith.addf %115, %114 : vector<8x8xf32>
      %117 = math.log %116 : vector<8x8xf32>
      %118 = arith.addf %110, %117 : vector<8x8xf32>
      %119 = vector.broadcast %1 : vector<8x1xf32> to vector<8x8xf32>
      %120 = arith.addf %119, %118 : vector<8x8xf32>
      %121 = math.exp %120 : vector<8x8xf32>
      %122 = arith.select %4, %92, %121 : vector<8x8xi1>, vector<8x8xf32>
      %123 = arith.index_cast %7 : i32 to index
      %c0_50 = arith.constant 0 : index
      %c0_51 = arith.constant 0 : index
      %124 = vector.load %arg14[%123, %c0_50, %c0_51] : memref<5x8x8xf32, #tpu.memory_space<vmem>>, vector<1x8x8xf32>
      %125 = vector.shape_cast %124 : vector<1x8x8xf32> to vector<8x8xf32>
      %126 = vector.shape_cast %122 : vector<8x8xf32> to vector<1x8x8xf32>
      tpu.vector_store %arg14[%123, %c0_50, %c0_51], %126 {strides = array<i32>} : memref<5x8x8xf32, #tpu.memory_space<vmem>>, vector<1x8x8xf32>,
    }
    %c5_i32_3 = arith.constant 5 : i32
    return
  }
  func.func @transform_0(%arg0: i32) -> (i32, i32, i32) {
    %c0_i32 = arith.constant 0 : i32
    %c0_i32_0 = arith.constant 0 : i32
    %c0_i32_1 = arith.constant 0 : i32
    return %c0_i32, %arg0, %c0_i32_0 : i32, i32, i32
  }
  func.func @transform_1(%arg0: i32) -> (i32, i32, i32) {
    %c0_i32 = arith.constant 0 : i32
    %c0_i32_0 = arith.constant 0 : i32
    %c0_i32_1 = arith.constant 0 : i32
    %c0_i32_2 = arith.constant 0 : i32
    return %c0_i32, %c0_i32_0, %c0_i32_1 : i32, i32, i32
  }
  func.func @transform_2(%arg0: i32) -> (i32, i32, i32) {
    %c0_i32 = arith.constant 0 : i32
    %c0_i32_0 = arith.constant 0 : i32
    %c0_i32_1 = arith.constant 0 : i32
    %c0_i32_2 = arith.constant 0 : i32
    return %c0_i32, %c0_i32_0, %c0_i32_1 : i32, i32, i32
  }
  func.func @transform_3(%arg0: i32) -> (i32, i32, i32) {
    %c0_i32 = arith.constant 0 : i32
    %c0_i32_0 = arith.constant 0 : i32
    %c0_i32_1 = arith.constant 0 : i32
    %c0_i32_2 = arith.constant 0 : i32
    return %c0_i32, %c0_i32_0, %c0_i32_1 : i32, i32, i32
  }
  func.func @transform_4(%arg0: i32) -> (i32, i32, i32) {
    %c0_i32 = arith.constant 0 : i32
    %c0_i32_0 = arith.constant 0 : i32
    %c0_i32_1 = arith.constant 0 : i32
    %c0_i32_2 = arith.constant 0 : i32
    return %c0_i32, %c0_i32_0, %c0_i32_1 : i32, i32, i32
  }
  func.func @transform_5(%arg0: i32) -> (i32, i32, i32) {
    %c0_i32 = arith.constant 0 : i32
    %c0_i32_0 = arith.constant 0 : i32
    %c0_i32_1 = arith.constant 0 : i32
    %c0_i32_2 = arith.constant 0 : i32
    return %c0_i32, %c0_i32_0, %c0_i32_1 : i32, i32, i32
  }
  func.func @transform_6(%arg0: i32) -> (i32, i32, i32) {
    %c0_i32 = arith.constant 0 : i32
    %c0_i32_0 = arith.constant 0 : i32
    %c0_i32_1 = arith.constant 0 : i32
    %c0_i32_2 = arith.constant 0 : i32
    return %c0_i32, %c0_i32_0, %c0_i32_1 : i32, i32, i32
  }
  func.func @transform_7(%arg0: i32) -> (i32, i32, i32) {
    %c0_i32 = arith.constant 0 : i32
    %c0_i32_0 = arith.constant 0 : i32
    %c0_i32_1 = arith.constant 0 : i32
    %c0_i32_2 = arith.constant 0 : i32
    return %c0_i32, %c0_i32_0, %c0_i32_1 : i32, i32, i32
  }
  func.func @transform_8(%arg0: i32) -> (i32, i32, i32) {
    %c0_i32 = arith.constant 0 : i32
    %c0_i32_0 = arith.constant 0 : i32
    %c0_i32_1 = arith.constant 0 : i32
    %c0_i32_2 = arith.constant 0 : i32
    return %c0_i32, %c0_i32_0, %c0_i32_1 : i32, i32, i32
  }
  func.func @transform_9(%arg0: i32) -> (i32, i32, i32) {
    %c0_i32 = arith.constant 0 : i32
    %c0_i32_0 = arith.constant 0 : i32
    %c0_i32_1 = arith.constant 0 : i32
    %c0_i32_2 = arith.constant 0 : i32
    return %c0_i32, %c0_i32_0, %c0_i32_1 : i32, i32, i32
  }
  func.func @transform_10(%arg0: i32) -> (i32, i32, i32) {
    %c0_i32 = arith.constant 0 : i32
    %c0_i32_0 = arith.constant 0 : i32
    %c0_i32_1 = arith.constant 0 : i32
    %c0_i32_2 = arith.constant 0 : i32
    return %c0_i32, %c0_i32_0, %c0_i32_1 : i32, i32, i32
  }
  func.func @transform_11(%arg0: i32) -> (i32, i32) {
    %c0_i32 = arith.constant 0 : i32
    %c0_i32_0 = arith.constant 0 : i32
    %c0_i32_1 = arith.constant 0 : i32
    return %c0_i32, %c0_i32_0 : i32, i32
  }
  func.func @transform_12(%arg0: i32) -> (i32, i32) {
    %c0_i32 = arith.constant 0 : i32
    %c0_i32_0 = arith.constant 0 : i32
    %c0_i32_1 = arith.constant 0 : i32
    return %c0_i32, %c0_i32_0 : i32, i32
  }
  func.func @transform_13(%arg0: i32) -> (i32, i32, i32) {
    %c0_i32 = arith.constant 0 : i32
    %c0_i32_0 = arith.constant 0 : i32
    %c0_i32_1 = arith.constant 0 : i32
    return %c0_i32, %c0_i32_0, %arg0 : i32, i32, i32
  }
}

</mosaic_0001>

<llo_original>
// kernel: tpu_custom_call.1
$region0: #{tpu_custom_call.1}
  #allocation0 [shape = 'u32[]', space=smem, size = 0x4, offset = 0x4, fixed_abs, tag = 'smem constant byte address 0x4 - core index']
  #allocation1 [shape = 'u32[72,128]{1,0:T(1,128)}', space=vmem, size = 0x9000, scoped, tag = 'internal scratch']
  %s0 = inlined_call_operand.vmem [shape: f32[5,8,4], index: 0, kind: input, shape index: {}]
  %s1 = inlined_call_operand.vmem [shape: bf16[5,4,256], index: 1, kind: input, shape index: {}]
  %s2 = inlined_call_operand.vmem [shape: f32[5,1,256], index: 2, kind: input, shape index: {}]
  %s3 = inlined_call_operand.hbm [shape: bf16[5,256,256], index: 3, kind: input, shape index: {}]
  %s4 = inlined_call_operand.vmem [shape: f32[5,1,256], index: 4, kind: input, shape index: {}]
  %s5 = inlined_call_operand.hbm [shape: bf16[5,256,256], index: 5, kind: input, shape index: {}]
  %s6 = inlined_call_operand.vmem [shape: f32[5,1,256], index: 6, kind: input, shape index: {}]
  %s7 = inlined_call_operand.hbm [shape: bf16[5,256,256], index: 7, kind: input, shape index: {}]
  %s8 = inlined_call_operand.vmem [shape: f32[5,1,256], index: 8, kind: input, shape index: {}]
  %s9 = inlined_call_operand.vmem [shape: bf16[5,8,256], index: 9, kind: input, shape index: {}]
  %s10 = inlined_call_operand.vmem [shape: f32[5,8,1], index: 10, kind: input, shape index: {}]
  %s11 = inlined_call_operand.vmem [shape: f32[8,1], index: 11, kind: input, shape index: {}]
  %s12 = inlined_call_operand.vmem [shape: f32[8,1], index: 12, kind: input, shape index: {}]
  %s13 = inlined_call_operand.hbm [shape: f32[5,8,8], index: 13, kind: output, shape index: {}]
  %s14 = sld [smem:[#allocation0]]
  $region81: #{tpu_custom_call.1} parent=0
    _
  %s16 = ssub.s32 1, %s14
  %s17 = scalar_select 0, %s16, %s14
  $region1: #{tpu_custom_call.1} parent=0
    #allocation2 [shape = 'u8[655360]{0}', space=vmem, size = 0xa0000, scoped, tag = 'input window, operand 3, single buffered']
    #allocation3 [shape = 's32[1]{0}', space=sflag, size = 0x4, scoped, tag = 'scoped memory for tpu_custom_call.1']
    #allocation4 [shape = 's32[1]{0}', space=sflag, size = 0x4, scoped, tag = 'scoped memory for tpu_custom_call.1']
    #allocation5 [shape = 'u8[655360]{0}', space=vmem, size = 0xa0000, scoped, tag = 'input window, operand 5, single buffered']
    #allocation6 [shape = 's32[1]{0}', space=sflag, size = 0x4, scoped, tag = 'scoped memory for tpu_custom_call.1']
    #allocation7 [shape = 'u8[655360]{0}', space=vmem, size = 0xa0000, scoped, tag = 'input window, operand 7, single buffered']
    #allocation8 [shape = 'u8[20480]{0}', space=vmem, size = 0x5000, scoped, tag = 'output window, operand 0, single buffered']
    %18 = vsyncpa [#allocation3], 0
    %19 = vsyncpa [#allocation6], 0
    %20 = vsyncpa [#allocation4], 0
    // Predicated region
    $region2: #{tpu_custom_call.1} parent=1 // pred_check
      _
    $region3: #{tpu_custom_call.1} parent=1 // pred_check_branch
      %22 = sbr.rel (0) target = $region5
    $region4: #{tpu_custom_call.1} parent=1 // pred_region
      _
    $region5: #{tpu_custom_call.1} parent=1 // pred_fallthru
      _
    // Predicated region
    $region6: #{tpu_custom_call.1} parent=1 // pred_check
      _
    $region7: #{tpu_custom_call.1} parent=1 // pred_check_branch
      %24 = sbr.rel (0) target = $region9
    $region8: #{tpu_custom_call.1} parent=1 // pred_region
      _
    $region9: #{tpu_custom_call.1} parent=1 // pred_fallthru
      _
    // Predicated region
    $region10: #{tpu_custom_call.1} parent=1 // pred_check
      _
    $region11: #{tpu_custom_call.1} parent=1 // pred_check_branch
      %26 = sbr.rel (0) target = $region13
    $region12: #{tpu_custom_call.1} parent=1 // pred_region
      _
    $region13: #{tpu_custom_call.1} parent=1 // pred_fallthru
      _
    // Predicated region
    $region14: #{tpu_custom_call.1} parent=1 // pred_check
      _
    $region15: #{tpu_custom_call.1} parent=1 // pred_check_branch
      %28 = sbr.rel (0) target = $region17
    $region16: #{tpu_custom_call.1} parent=1 // pred_region
      %30 = vsyncadd [#allocation3], 0
      %s31 = sshll.u32 %s3, 4
      %s32 = int_to_ptr.hbm [resolvable:$true] %s31
      %s33 = sshll.u32 [#allocation2], 4
      %s34 = int_to_ptr.vmem [resolvable:$true] %s33
      %39 = dma.hbm_to_vmem [thread:$0]  %s32, 20480, %s34, [#allocation3], 128, 128, 8
    $region17: #{tpu_custom_call.1} parent=1 // pred_fallthru
      _
    // Predicated region
    $region18: #{tpu_custom_call.1} parent=1 // pred_check
      _
    $region19: #{tpu_custom_call.1} parent=1 // pred_check_branch
      %41 = sbr.rel (0) target = $region21
    $region20: #{tpu_custom_call.1} parent=1 // pred_region
      _
    $region21: #{tpu_custom_call.1} parent=1 // pred_fallthru
      _
    // Predicated region
    $region22: #{tpu_custom_call.1} parent=1 // pred_check
      _
    $region23: #{tpu_custom_call.1} parent=1 // pred_check_branch
      %43 = sbr.rel (0) target = $region25
    $region24: #{tpu_custom_call.1} parent=1 // pred_region
      %45 = vsyncadd [#allocation6], 0
      %s46 = sshll.u32 %s5, 4
      %s47 = int_to_ptr.hbm [resolvable:$true] %s46
      %s48 = sshll.u32 [#allocation5], 4
      %s49 = int_to_ptr.vmem [resolvable:$true] %s48
      %54 = dma.hbm_to_vmem [thread:$0]  %s47, 20480, %s49, [#allocation6], 128, 128, 8
    $region25: #{tpu_custom_call.1} parent=1 // pred_fallthru
      _
    // Predicated region
    $region26: #{tpu_custom_call.1} parent=1 // pred_check
      _
    $region27: #{tpu_custom_call.1} parent=1 // pred_check_branch
      %56 = sbr.rel (0) target = $region29
    $region28: #{tpu_custom_call.1} parent=1 // pred_region
      _
    $region29: #{tpu_custom_call.1} parent=1 // pred_fallthru
      _
    // Predicated region
    $region30: #{tpu_custom_call.1} parent=1 // pred_check
      _
    $region31: #{tpu_custom_call.1} parent=1 // pred_check_branch
      %58 = sbr.rel (0) target = $region33
    $region32: #{tpu_custom_call.1} parent=1 // pred_region
      %60 = vsyncadd [#allocation6], 0
      %s61 = sshll.u32 %s7, 4
      %s62 = int_to_ptr.hbm [resolvable:$true] %s61
      %s63 = sshll.u32 [#allocation7], 4
      %s64 = int_to_ptr.vmem [resolvable:$true] %s63
      %69 = dma.hbm_to_vmem [thread:$0]  %s62, 20480, %s64, [#allocation6], 128, 128, 8
    $region33: #{tpu_custom_call.1} parent=1 // pred_fallthru
      _
    // Predicated region
    $region34: #{tpu_custom_call.1} parent=1 // pred_check
      _
    $region35: #{tpu_custom_call.1} parent=1 // pred_check_branch
      %71 = sbr.rel (0) target = $region37
    $region36: #{tpu_custom_call.1} parent=1 // pred_region
      _
    $region37: #{tpu_custom_call.1} parent=1 // pred_fallthru
      _
    // Predicated region
    $region38: #{tpu_custom_call.1} parent=1 // pred_check
      _
    $region39: #{tpu_custom_call.1} parent=1 // pred_check_branch
      %73 = sbr.rel (0) target = $region41
    $region40: #{tpu_custom_call.1} parent=1 // pred_region
      _
    $region41: #{tpu_custom_call.1} parent=1 // pred_fallthru
      _
    // Predicated region
    $region42: #{tpu_custom_call.1} parent=1 // pred_check
      _
    $region43: #{tpu_custom_call.1} parent=1 // pred_check_branch
      %75 = sbr.rel (0) target = $region45
    $region44: #{tpu_custom_call.1} parent=1 // pred_region
      _
    $region45: #{tpu_custom_call.1} parent=1 // pred_fallthru
      _
    // Predicated region
    $region46: #{tpu_custom_call.1} parent=1 // pred_check
      _
    $region47: #{tpu_custom_call.1} parent=1 // pred_check_branch
      %77 = sbr.rel (0) target = $region49
    $region48: #{tpu_custom_call.1} parent=1 // pred_region
      _
    $region49: #{tpu_custom_call.1} parent=1 // pred_fallthru
      _
    // Predicated region
    $region50: #{tpu_custom_call.1} parent=1 // pred_check
      _
    $region51: #{tpu_custom_call.1} parent=1 // pred_check_branch
      %79 = sbr.rel (0) target = $region53
    $region52: #{tpu_custom_call.1} parent=1 // pred_region
      _
    $region53: #{tpu_custom_call.1} parent=1 // pred_fallthru
      _
    // Predicated region
    $region54: #{tpu_custom_call.1} parent=1 // pred_check
      _
    $region55: #{tpu_custom_call.1} parent=1 // pred_check_branch
      %81 = sbr.rel (0) target = $region57
    $region56: #{tpu_custom_call.1} parent=1 // pred_region
      %83 = dma.done [#allocation3], 20480
    $region57: #{tpu_custom_call.1} parent=1 // pred_fallthru
      _
    // Predicated region
    $region58: #{tpu_custom_call.1} parent=1 // pred_check
      _
    $region59: #{tpu_custom_call.1} parent=1 // pred_check_branch
      %85 = sbr.rel (0) target = $region61
    $region60: #{tpu_custom_call.1} parent=1 // pred_region
      %87 = dma.done [#allocation6], 20480
    $region61: #{tpu_custom_call.1} parent=1 // pred_fallthru
      _
    // Predicated region
    $region62: #{tpu_custom_call.1} parent=1 // pred_check
      _
    $region63: #{tpu_custom_call.1} parent=1 // pred_check_branch
      %89 = sbr.rel (0) target = $region65
    $region64: #{tpu_custom_call.1} parent=1 // pred_region
      %91 = dma.done [#allocation6], 20480
    $region65: #{tpu_custom_call.1} parent=1 // pred_fallthru
      _
    %v93 = vld [vmem:[%s11] sm:$0xff]
    %v94 = vld [vmem:[%s12] sm:$0xff]
    %v95 = vlaneseq
    %v96 = vshrl.u32 %v95, 7
    %vm97 = vcmp.lt.s32.totalorder %v96, 4
    loop: start=0, step=1, limit=5
    $region66: #{tpu_custom_call.1} parent=1 // loop_pre_header
      _
    $region67: #{tpu_custom_call.1} parent=1 // loop_header
      %s99 = sphi 0, %s103
      %p100 = scmp.ge.s32.totalorder %s99, 5
    $region68: #{tpu_custom_call.1} parent=1 // loop_header_branch
      %102 = sbr.rel (%p100) target = $region72
    $region69: #{tpu_custom_call.1} parent=1 // loop_body
      %s104 = smul.u32 %s99, 8
      %s105 = scalar_lea.vmem %s0, %s104
      %v106 = vld [vmem:[%s105] sm:$0xff]
      %v107 = vpack.c.bf16 %v106, %v106
      %s108 = smul.u32 %s99, 2
      %s109 = smul.addr %s108, 2
      %s110 = scalar_lea.vmem %s1, %s109
      %v111 = vld [vmem:[%s110] sm:$0xf]
      %s112 = scalar_lea.vmem %s2, %s108
      %v113 = vld [vmem:[%s112] sm:$0x3]
      %v115 = vperm.slane %v113, 0
      %v116 = vperm.slane %v113, 1
      %120 = vst [vmem:[#allocation1] ss:$4 sm:$0xff] %v111
      %v121 = vld.sshfl [vmem:[#allocation1] sm:$0xff pattern:$0x73625140]
      %v122 = vld.sshfl [vmem:[#allocation1 + $0x8] sm:$0xff pattern:$0x73625140]
      %vm123 = vcmask 31744
      %v125 = vsel %vm123, %v107, 0
      %vm127 = vcmask 1041408
      %v128 = vsel %vm127, %v121, 0
      %v130 = vsel %vm127, %v122, 0
      %132 = vmatpush.bf16.msra.mxu0 0
      %133 = vmatpush.bf16.msra.mxu0 0
      %134 = vmatpush.bf16.msra.mxu0 0
      %135 = vmatpush.bf16.msra.mxu0 0
      %136 = vmatpush.bf16.msra.mxu0 0
      %137 = vmatpush.bf16.msra.mxu0 0
      %138 = vmatpush.bf16.msra.mxu0 0
      %139 = vmatpush.bf16.msra.mxu0 %v128
      %140 = vmatmul.bf16.gmra.mxu0 %v125
      %v141 = vpop.f32.mrf.mxu0
      %v142 = vadd.f32 %v115, %v141
      %v143 = vpop.f32.mrf.mxu0
      %144 = vdwg.mxu0
      %145 = vmatpush.bf16.msra.mxu0 0
      %146 = vmatpush.bf16.msra.mxu0 0
      %147 = vmatpush.bf16.msra.mxu0 0
      %148 = vmatpush.bf16.msra.mxu0 0
      %149 = vmatpush.bf16.msra.mxu0 0
      %150 = vmatpush.bf16.msra.mxu0 0
      %151 = vmatpush.bf16.msra.mxu0 0
      %152 = vmatpush.bf16.msra.mxu0 %v130
      %153 = vmatmul.bf16.gmra.mxu0 %v125
      %v154 = vpop.f32.mrf.mxu0
      %v155 = vadd.f32 %v116, %v154
      %v156 = vpop.f32.mrf.mxu0
      %157 = vdwg.mxu0
      %v158 = vmul.f32 %v142, 0.5
      %v159 = vmul.f32 %v155, 0.5
      %v160 = vtanh.pop %v158
      %v161 = vtanh.pop %v159
      %v162 = vmul.f32 %v160, 0.5
      %v163 = vmul.f32 %v161, 0.5
      %v164 = vadd.f32 %v162, 0.5
      %v165 = vadd.f32 %v163, 0.5
      %v166 = vmul.f32 %v142, %v164
      %v167 = vmul.f32 %v155, %v165
      %v168 = vpack.c.bf16 %v166, %v166
      %v169 = vpack.c.bf16 %v167, %v167
      %s170 = smul.u32 %s99, 64
      %s171 = smul.addr %s170, 4
      %s172 = scalar_lea.vmem [#allocation2], %s171
      %v173 = vld [vmem:[%s172] sm:$0xff]
      %v174 = vld [vmem:[%s172 + $0x8] sm:$0xff]
      %v175 = vld [vmem:[%s172 + $0x10] sm:$0xff]
      %v176 = vld [vmem:[%s172 + $0x18] sm:$0xff]
      %v177 = vld [vmem:[%s172 + $0x20] sm:$0xff]
      %v178 = vld [vmem:[%s172 + $0x28] sm:$0xff]
      %v179 = vld [vmem:[%s172 + $0x30] sm:$0xff]
      %v180 = vld [vmem:[%s172 + $0x38] sm:$0xff]
      %v181 = vld [vmem:[%s172 + $0x40] sm:$0xff]
      %v182 = vld [vmem:[%s172 + $0x48] sm:$0xff]
      %v183 = vld [vmem:[%s172 + $0x50] sm:$0xff]
      %v184 = vld [vmem:[%s172 + $0x58] sm:$0xff]
      %v185 = vld [vmem:[%s172 + $0x60] sm:$0xff]
      %v186 = vld [vmem:[%s172 + $0x68] sm:$0xff]
      %v187 = vld [vmem:[%s172 + $0x70] sm:$0xff]
      %v188 = vld [vmem:[%s172 + $0x78] sm:$0xff]
      %v189 = vld [vmem:[%s172 + $0x80] sm:$0xff]
      %v190 = vld [vmem:[%s172 + $0x88] sm:$0xff]
      %v191 = vld [vmem:[%s172 + $0x90] sm:$0xff]
      %v192 = vld [vmem:[%s172 + $0x98] sm:$0xff]
      %v193 = vld [vmem:[%s172 + $0xa0] sm:$0xff]
      %v194 = vld [vmem:[%s172 + $0xa8] sm:$0xff]
      %v195 = vld [vmem:[%s172 + $0xb0] sm:$0xff]
      %v196 = vld [vmem:[%s172 + $0xb8] sm:$0xff]
      %v197 = vld [vmem:[%s172 + $0xc0] sm:$0xff]
      %v198 = vld [vmem:[%s172 + $0xc8] sm:$0xff]
      %v199 = vld [vmem:[%s172 + $0xd0] sm:$0xff]
      %v200 = vld [vmem:[%s172 + $0xd8] sm:$0xff]
      %v201 = vld [vmem:[%s172 + $0xe0] sm:$0xff]
      %v202 = vld [vmem:[%s172 + $0xe8] sm:$0xff]
      %v203 = vld [vmem:[%s172 + $0xf0] sm:$0xff]
      %v204 = vld [vmem:[%s172 + $0xf8] sm:$0xff]
      %s205 = scalar_lea.vmem %s4, %s108
      %v206 = vld [vmem:[%s205] sm:$0x3]
      %v208 = vperm.slane %v206, 0
      %v209 = vperm.slane %v206, 1
      %v244 = vunpack.c.l.b16 %v173
      %v245 = vunpack.c.h.b16 %v173
      %v246 = vunpack.c.l.b16 %v174
      %v247 = vunpack.c.h.b16 %v174
      %v248 = vunpack.c.l.b16 %v175
      %v249 = vunpack.c.h.b16 %v175
      %v250 = vunpack.c.l.b16 %v176
      %v251 = vunpack.c.h.b16 %v176
      %v252 = vunpack.c.l.b16 %v177
      %v253 = vunpack.c.h.b16 %v177
      %v254 = vunpack.c.l.b16 %v178
      %v255 = vunpack.c.h.b16 %v178
      %v256 = vunpack.c.l.b16 %v179
      %v257 = vunpack.c.h.b16 %v179
      %v258 = vunpack.c.l.b16 %v180
      %v259 = vunpack.c.h.b16 %v180
      %v260 = vunpack.c.l.b16 %v181
      %v261 = vunpack.c.h.b16 %v181
      %v262 = vunpack.c.l.b16 %v182
      %v263 = vunpack.c.h.b16 %v182
      %v264 = vunpack.c.l.b16 %v183
      %v265 = vunpack.c.h.b16 %v183
      %v266 = vunpack.c.l.b16 %v184
      %v267 = vunpack.c.h.b16 %v184
      %v268 = vunpack.c.l.b16 %v185
      %v269 = vunpack.c.h.b16 %v185
      %v270 = vunpack.c.l.b16 %v186
      %v271 = vunpack.c.h.b16 %v186
      %v272 = vunpack.c.l.b16 %v187
      %v273 = vunpack.c.h.b16 %v187
      %v274 = vunpack.c.l.b16 %v188
      %v275 = vunpack.c.h.b16 %v188
      %v276 = vunpack.c.l.b16 %v189
      %v277 = vunpack.c.h.b16 %v189
      %v278 = vunpack.c.l.b16 %v190
      %v279 = vunpack.c.h.b16 %v190
      %v280 = vunpack.c.l.b16 %v191
      %v281 = vunpack.c.h.b16 %v191
      %v282 = vunpack.c.l.b16 %v192
      %v283 = vunpack.c.h.b16 %v192
      %v284 = vunpack.c.l.b16 %v193
      %v285 = vunpack.c.h.b16 %v193
      %v286 = vunpack.c.l.b16 %v194
      %v287 = vunpack.c.h.b16 %v194
      %v288 = vunpack.c.l.b16 %v195
      %v289 = vunpack.c.h.b16 %v195
      %v290 = vunpack.c.l.b16 %v196
      %v291 = vunpack.c.h.b16 %v196
      %v292 = vunpack.c.l.b16 %v197
      %v293 = vunpack.c.h.b16 %v197
      %v294 = vunpack.c.l.b16 %v198
      %v295 = vunpack.c.h.b16 %v198
      %v296 = vunpack.c.l.b16 %v199
      %v297 = vunpack.c.h.b16 %v199
      %v298 = vunpack.c.l.b16 %v200
      %v299 = vunpack.c.h.b16 %v200
      %v300 = vunpack.c.l.b16 %v201
      %v301 = vunpack.c.h.b16 %v201
      %v302 = vunpack.c.l.b16 %v202
      %v303 = vunpack.c.h.b16 %v202
      %v304 = vunpack.c.l.b16 %v203
      %v305 = vunpack.c.h.b16 %v203
      %v306 = vunpack.c.l.b16 %v204
      %v307 = vunpack.c.h.b16 %v204
      %v308 = vpack.c.b16 %v246, %v244
      %v309 = vpack.c.b16 %v247, %v245
      %v310 = vpack.c.b16 %v250, %v248
      %v311 = vpack.c.b16 %v251, %v249
      %v312 = vpack.c.b16 %v254, %v252
      %v313 = vpack.c.b16 %v255, %v253
      %v314 = vpack.c.b16 %v258, %v256
      %v315 = vpack.c.b16 %v259, %v257
      %v316 = vpack.c.b16 %v262, %v260
      %v317 = vpack.c.b16 %v263, %v261
      %v318 = vpack.c.b16 %v266, %v264
      %v319 = vpack.c.b16 %v267, %v265
      %v320 = vpack.c.b16 %v270, %v268
      %v321 = vpack.c.b16 %v271, %v269
      %v322 = vpack.c.b16 %v274, %v272
      %v323 = vpack.c.b16 %v275, %v273
      %v324 = vpack.c.b16 %v278, %v276
      %v325 = vpack.c.b16 %v279, %v277
      %v326 = vpack.c.b16 %v282, %v280
      %v327 = vpack.c.b16 %v283, %v281
      %v328 = vpack.c.b16 %v286, %v284
      %v329 = vpack.c.b16 %v287, %v285
      %v330 = vpack.c.b16 %v290, %v288
      %v331 = vpack.c.b16 %v291, %v289
      %v332 = vpack.c.b16 %v294, %v292
      %v333 = vpack.c.b16 %v295, %v293
      %v334 = vpack.c.b16 %v298, %v296
      %v335 = vpack.c.b16 %v299, %v297
      %v336 = vpack.c.b16 %v302, %v300
      %v337 = vpack.c.b16 %v303, %v301
      %v338 = vpack.c.b16 %v306, %v304
      %v339 = vpack.c.b16 %v307, %v305
      %372 = vmatpush.bf16.msra.mxu0 %v322
      %373 = vmatpush.bf16.msra.mxu0 %v320
      %374 = vmatpush.bf16.msra.mxu0 %v318
      %375 = vmatpush.bf16.msra.mxu0 %v316
      %376 = vmatpush.bf16.msra.mxu0 %v314
      %377 = vmatpush.bf16.msra.mxu0 %v312
      %378 = vmatpush.bf16.msra.mxu0 %v310
      %379 = vmatpush.bf16.msra.mxu0 %v308
      %380 = vmatmul.bf16.gmra.mxu0 %v168
      %v381 = vpop.f32.mrf.mxu0
      %v382 = vadd.f32 %v208, %v381
      %v383 = vpop.f32.mrf.mxu0
      %384 = vdwg.mxu0
      %385 = vmatpush.bf16.msra.mxu0 %v338
      %386 = vmatpush.bf16.msra.mxu0 %v336
      %387 = vmatpush.bf16.msra.mxu0 %v334
      %388 = vmatpush.bf16.msra.mxu0 %v332
      %389 = vmatpush.bf16.msra.mxu0 %v330
      %390 = vmatpush.bf16.msra.mxu0 %v328
      %391 = vmatpush.bf16.msra.mxu0 %v326
      %392 = vmatpush.bf16.msra.mxu0 %v324
      %393 = vmatmul.bf16.gmra.mxu0 %v169
      %v394 = vpop.f32.mrf.mxu0
      %v395 = vadd.f32 %v382, %v394
      %v396 = vpop.f32.mrf.mxu0
      %397 = vdwg.mxu0
      %398 = vmatpush.bf16.msra.mxu0 %v323
      %399 = vmatpush.bf16.msra.mxu0 %v321
      %400 = vmatpush.bf16.msra.mxu0 %v319
      %401 = vmatpush.bf16.msra.mxu0 %v317
      %402 = vmatpush.bf16.msra.mxu0 %v315
      %403 = vmatpush.bf16.msra.mxu0 %v313
      %404 = vmatpush.bf16.msra.mxu0 %v311
      %405 = vmatpush.bf16.msra.mxu0 %v309
      %406 = vmatmul.bf16.gmra.mxu0 %v168
      %v407 = vpop.f32.mrf.mxu0
      %v408 = vadd.f32 %v209, %v407
      %v409 = vpop.f32.mrf.mxu0
      %410 = vdwg.mxu0
      %411 = vmatpush.bf16.msra.mxu0 %v339
      %412 = vmatpush.bf16.msra.mxu0 %v337
      %413 = vmatpush.bf16.msra.mxu0 %v335
      %414 = vmatpush.bf16.msra.mxu0 %v333
      %415 = vmatpush.bf16.msra.mxu0 %v331
      %416 = vmatpush.bf16.msra.mxu0 %v329
      %417 = vmatpush.bf16.msra.mxu0 %v327
      %418 = vmatpush.bf16.msra.mxu0 %v325
      %419 = vmatmul.bf16.gmra.mxu0 %v169
      %v420 = vpop.f32.mrf.mxu0
      %v421 = vadd.f32 %v408, %v420
      %v422 = vpop.f32.mrf.mxu0
      %423 = vdwg.mxu0
      %v424 = vmul.f32 %v395, 0.5
      %v425 = vmul.f32 %v421, 0.5
      %v426 = vtanh.pop %v424
      %v427 = vtanh.pop %v425
      %v428 = vmul.f32 %v426, 0.5
      %v429 = vmul.f32 %v427, 0.5
      %v430 = vadd.f32 %v428, 0.5
      %v431 = vadd.f32 %v429, 0.5
      %v432 = vmul.f32 %v395, %v430
      %v433 = vmul.f32 %v421, %v431
      %v434 = vpack.c.bf16 %v432, %v432
      %v435 = vpack.c.bf16 %v433, %v433
      %s436 = smul.addr %s170, 4
      %s437 = scalar_lea.vmem [#allocation5], %s436
      %v438 = vld [vmem:[%s437] sm:$0xff]
      %v439 = vld [vmem:[%s437 + $0x8] sm:$0xff]
      %v440 = vld [vmem:[%s437 + $0x10] sm:$0xff]
      %v441 = vld [vmem:[%s437 + $0x18] sm:$0xff]
      %v442 = vld [vmem:[%s437 + $0x20] sm:$0xff]
      %v443 = vld [vmem:[%s437 + $0x28] sm:$0xff]
      %v444 = vld [vmem:[%s437 + $0x30] sm:$0xff]
      %v445 = vld [vmem:[%s437 + $0x38] sm:$0xff]
      %v446 = vld [vmem:[%s437 + $0x40] sm:$0xff]
      %v447 = vld [vmem:[%s437 + $0x48] sm:$0xff]
      %v448 = vld [vmem:[%s437 + $0x50] sm:$0xff]
      %v449 = vld [vmem:[%s437 + $0x58] sm:$0xff]
      %v450 = vld [vmem:[%s437 + $0x60] sm:$0xff]
      %v451 = vld [vmem:[%s437 + $0x68] sm:$0xff]
      %v452 = vld [vmem:[%s437 + $0x70] sm:$0xff]
      %v453 = vld [vmem:[%s437 + $0x78] sm:$0xff]
      %v454 = vld [vmem:[%s437 + $0x80] sm:$0xff]
      %v455 = vld [vmem:[%s437 + $0x88] sm:$0xff]
      %v456 = vld [vmem:[%s437 + $0x90] sm:$0xff]
      %v457 = vld [vmem:[%s437 + $0x98] sm:$0xff]
      %v458 = vld [vmem:[%s437 + $0xa0] sm:$0xff]
      %v459 = vld [vmem:[%s437 + $0xa8] sm:$0xff]
      %v460 = vld [vmem:[%s437 + $0xb0] sm:$0xff]
      %v461 = vld [vmem:[%s437 + $0xb8] sm:$0xff]
      %v462 = vld [vmem:[%s437 + $0xc0] sm:$0xff]
      %v463 = vld [vmem:[%s437 + $0xc8] sm:$0xff]
      %v464 = vld [vmem:[%s437 + $0xd0] sm:$0xff]
      %v465 = vld [vmem:[%s437 + $0xd8] sm:$0xff]
      %v466 = vld [vmem:[%s437 + $0xe0] sm:$0xff]
      %v467 = vld [vmem:[%s437 + $0xe8] sm:$0xff]
      %v468 = vld [vmem:[%s437 + $0xf0] sm:$0xff]
      %v469 = vld [vmem:[%s437 + $0xf8] sm:$0xff]
      %s470 = scalar_lea.vmem %s6, %s108
      %v471 = vld [vmem:[%s470] sm:$0x3]
      %v473 = vperm.slane %v471, 0
      %v474 = vperm.slane %v471, 1
      %v509 = vunpack.c.l.b16 %v438
      %v510 = vunpack.c.h.b16 %v438
      %v511 = vunpack.c.l.b16 %v439
      %v512 = vunpack.c.h.b16 %v439
      %v513 = vunpack.c.l.b16 %v440
      %v514 = vunpack.c.h.b16 %v440
      %v515 = vunpack.c.l.b16 %v441
      %v516 = vunpack.c.h.b16 %v441
      %v517 = vunpack.c.l.b16 %v442
      %v518 = vunpack.c.h.b16 %v442
      %v519 = vunpack.c.l.b16 %v443
      %v520 = vunpack.c.h.b16 %v443
      %v521 = vunpack.c.l.b16 %v444
      %v522 = vunpack.c.h.b16 %v444
      %v523 = vunpack.c.l.b16 %v445
      %v524 = vunpack.c.h.b16 %v445
      %v525 = vunpack.c.l.b16 %v446
      %v526 = vunpack.c.h.b16 %v446
      %v527 = vunpack.c.l.b16 %v447
      %v528 = vunpack.c.h.b16 %v447
      %v529 = vunpack.c.l.b16 %v448
      %v530 = vunpack.c.h.b16 %v448
      %v531 = vunpack.c.l.b16 %v449
      %v532 = vunpack.c.h.b16 %v449
      %v533 = vunpack.c.l.b16 %v450
      %v534 = vunpack.c.h.b16 %v450
      %v535 = vunpack.c.l.b16 %v451
      %v536 = vunpack.c.h.b16 %v451
      %v537 = vunpack.c.l.b16 %v452
      %v538 = vunpack.c.h.b16 %v452
      %v539 = vunpack.c.l.b16 %v453
      %v540 = vunpack.c.h.b16 %v453
      %v541 = vunpack.c.l.b16 %v454
      %v542 = vunpack.c.h.b16 %v454
      %v543 = vunpack.c.l.b16 %v455
      %v544 = vunpack.c.h.b16 %v455
      %v545 = vunpack.c.l.b16 %v456
      %v546 = vunpack.c.h.b16 %v456
      %v547 = vunpack.c.l.b16 %v457
      %v548 = vunpack.c.h.b16 %v457
      %v549 = vunpack.c.l.b16 %v458
      %v550 = vunpack.c.h.b16 %v458
      %v551 = vunpack.c.l.b16 %v459
      %v552 = vunpack.c.h.b16 %v459
      %v553 = vunpack.c.l.b16 %v460
      %v554 = vunpack.c.h.b16 %v460
      %v555 = vunpack.c.l.b16 %v461
      %v556 = vunpack.c.h.b16 %v461
      %v557 = vunpack.c.l.b16 %v462
      %v558 = vunpack.c.h.b16 %v462
      %v559 = vunpack.c.l.b16 %v463
      %v560 = vunpack.c.h.b16 %v463
      %v561 = vunpack.c.l.b16 %v464
      %v562 = vunpack.c.h.b16 %v464
      %v563 = vunpack.c.l.b16 %v465
      %v564 = vunpack.c.h.b16 %v465
      %v565 = vunpack.c.l.b16 %v466
      %v566 = vunpack.c.h.b16 %v466
      %v567 = vunpack.c.l.b16 %v467
      %v568 = vunpack.c.h.b16 %v467
      %v569 = vunpack.c.l.b16 %v468
      %v570 = vunpack.c.h.b16 %v468
      %v571 = vunpack.c.l.b16 %v469
      %v572 = vunpack.c.h.b16 %v469
      %v573 = vpack.c.b16 %v511, %v509
      %v574 = vpack.c.b16 %v512, %v510
      %v575 = vpack.c.b16 %v515, %v513
      %v576 = vpack.c.b16 %v516, %v514
      %v577 = vpack.c.b16 %v519, %v517
      %v578 = vpack.c.b16 %v520, %v518
      %v579 = vpack.c.b16 %v523, %v521
      %v580 = vpack.c.b16 %v524, %v522
      %v581 = vpack.c.b16 %v527, %v525
      %v582 = vpack.c.b16 %v528, %v526
      %v583 = vpack.c.b16 %v531, %v529
      %v584 = vpack.c.b16 %v532, %v530
      %v585 = vpack.c.b16 %v535, %v533
      %v586 = vpack.c.b16 %v536, %v534
      %v587 = vpack.c.b16 %v539, %v537
      %v588 = vpack.c.b16 %v540, %v538
      %v589 = vpack.c.b16 %v543, %v541
      %v590 = vpack.c.b16 %v544, %v542
      %v591 = vpack.c.b16 %v547, %v545
      %v592 = vpack.c.b16 %v548, %v546
      %v593 = vpack.c.b16 %v551, %v549
      %v594 = vpack.c.b16 %v552, %v550
      %v595 = vpack.c.b16 %v555, %v553
      %v596 = vpack.c.b16 %v556, %v554
      %v597 = vpack.c.b16 %v559, %v557
      %v598 = vpack.c.b16 %v560, %v558
      %v599 = vpack.c.b16 %v563, %v561
      %v600 = vpack.c.b16 %v564, %v562
      %v601 = vpack.c.b16 %v567, %v565
      %v602 = vpack.c.b16 %v568, %v566
      %v603 = vpack.c.b16 %v571, %v569
      %v604 = vpack.c.b16 %v572, %v570
      %637 = vmatpush.bf16.msra.mxu0 %v587
      %638 = vmatpush.bf16.msra.mxu0 %v585
      %639 = vmatpush.bf16.msra.mxu0 %v583
      %640 = vmatpush.bf16.msra.mxu0 %v581
      %641 = vmatpush.bf16.msra.mxu0 %v579
      %642 = vmatpush.bf16.msra.mxu0 %v577
      %643 = vmatpush.bf16.msra.mxu0 %v575
      %644 = vmatpush.bf16.msra.mxu0 %v573
      %645 = vmatmul.bf16.gmra.mxu0 %v434
      %v646 = vpop.f32.mrf.mxu0
      %v647 = vadd.f32 %v473, %v646
      %v648 = vpop.f32.mrf.mxu0
      %649 = vdwg.mxu0
      %650 = vmatpush.bf16.msra.mxu0 %v603
      %651 = vmatpush.bf16.msra.mxu0 %v601
      %652 = vmatpush.bf16.msra.mxu0 %v599
      %653 = vmatpush.bf16.msra.mxu0 %v597
      %654 = vmatpush.bf16.msra.mxu0 %v595
      %655 = vmatpush.bf16.msra.mxu0 %v593
      %656 = vmatpush.bf16.msra.mxu0 %v591
      %657 = vmatpush.bf16.msra.mxu0 %v589
      %658 = vmatmul.bf16.gmra.mxu0 %v435
      %v659 = vpop.f32.mrf.mxu0
      %v660 = vadd.f32 %v647, %v659
      %v661 = vpop.f32.mrf.mxu0
      %662 = vdwg.mxu0
      %663 = vmatpush.bf16.msra.mxu0 %v588
      %664 = vmatpush.bf16.msra.mxu0 %v586
      %665 = vmatpush.bf16.msra.mxu0 %v584
      %666 = vmatpush.bf16.msra.mxu0 %v582
      %667 = vmatpush.bf16.msra.mxu0 %v580
      %668 = vmatpush.bf16.msra.mxu0 %v578
      %669 = vmatpush.bf16.msra.mxu0 %v576
      %670 = vmatpush.bf16.msra.mxu0 %v574
      %671 = vmatmul.bf16.gmra.mxu0 %v434
      %v672 = vpop.f32.mrf.mxu0
      %v673 = vadd.f32 %v474, %v672
      %v674 = vpop.f32.mrf.mxu0
      %675 = vdwg.mxu0
      %676 = vmatpush.bf16.msra.mxu0 %v604
      %677 = vmatpush.bf16.msra.mxu0 %v602
      %678 = vmatpush.bf16.msra.mxu0 %v600
      %679 = vmatpush.bf16.msra.mxu0 %v598
      %680 = vmatpush.bf16.msra.mxu0 %v596
      %681 = vmatpush.bf16.msra.mxu0 %v594
      %682 = vmatpush.bf16.msra.mxu0 %v592
      %683 = vmatpush.bf16.msra.mxu0 %v590
      %684 = vmatmul.bf16.gmra.mxu0 %v435
      %v685 = vpop.f32.mrf.mxu0
      %v686 = vadd.f32 %v673, %v685
      %v687 = vpop.f32.mrf.mxu0
      %688 = vdwg.mxu0
      %v689 = vmul.f32 %v660, 0.5
      %v690 = vmul.f32 %v686, 0.5
      %v691 = vtanh.pop %v689
      %v692 = vtanh.pop %v690
      %v693 = vmul.f32 %v691, 0.5
      %v694 = vmul.f32 %v692, 0.5
      %v695 = vadd.f32 %v693, 0.5
      %v696 = vadd.f32 %v694, 0.5
      %v697 = vmul.f32 %v660, %v695
      %v698 = vmul.f32 %v686, %v696
      %v699 = vpack.c.bf16 %v697, %v697
      %v700 = vpack.c.bf16 %v698, %v698
      %s701 = smul.addr %s170, 4
      %s702 = scalar_lea.vmem [#allocation7], %s701
      %v703 = vld [vmem:[%s702] sm:$0xff]
      %v704 = vld [vmem:[%s702 + $0x8] sm:$0xff]
      %v705 = vld [vmem:[%s702 + $0x10] sm:$0xff]
      %v706 = vld [vmem:[%s702 + $0x18] sm:$0xff]
      %v707 = vld [vmem:[%s702 + $0x20] sm:$0xff]
      %v708 = vld [vmem:[%s702 + $0x28] sm:$0xff]
      %v709 = vld [vmem:[%s702 + $0x30] sm:$0xff]
      %v710 = vld [vmem:[%s702 + $0x38] sm:$0xff]
      %v711 = vld [vmem:[%s702 + $0x40] sm:$0xff]
      %v712 = vld [vmem:[%s702 + $0x48] sm:$0xff]
      %v713 = vld [vmem:[%s702 + $0x50] sm:$0xff]
      %v714 = vld [vmem:[%s702 + $0x58] sm:$0xff]
      %v715 = vld [vmem:[%s702 + $0x60] sm:$0xff]
      %v716 = vld [vmem:[%s702 + $0x68] sm:$0xff]
      %v717 = vld [vmem:[%s702 + $0x70] sm:$0xff]
      %v718 = vld [vmem:[%s702 + $0x78] sm:$0xff]
      %v719 = vld [vmem:[%s702 + $0x80] sm:$0xff]
      %v720 = vld [vmem:[%s702 + $0x88] sm:$0xff]
      %v721 = vld [vmem:[%s702 + $0x90] sm:$0xff]
      %v722 = vld [vmem:[%s702 + $0x98] sm:$0xff]
      %v723 = vld [vmem:[%s702 + $0xa0] sm:$0xff]
      %v724 = vld [vmem:[%s702 + $0xa8] sm:$0xff]
      %v725 = vld [vmem:[%s702 + $0xb0] sm:$0xff]
      %v726 = vld [vmem:[%s702 + $0xb8] sm:$0xff]
      %v727 = vld [vmem:[%s702 + $0xc0] sm:$0xff]
      %v728 = vld [vmem:[%s702 + $0xc8] sm:$0xff]
      %v729 = vld [vmem:[%s702 + $0xd0] sm:$0xff]
      %v730 = vld [vmem:[%s702 + $0xd8] sm:$0xff]
      %v731 = vld [vmem:[%s702 + $0xe0] sm:$0xff]
      %v732 = vld [vmem:[%s702 + $0xe8] sm:$0xff]
      %v733 = vld [vmem:[%s702 + $0xf0] sm:$0xff]
      %v734 = vld [vmem:[%s702 + $0xf8] sm:$0xff]
      %s735 = scalar_lea.vmem %s8, %s108
      %v736 = vld [vmem:[%s735] sm:$0x3]
      %v738 = vperm.slane %v736, 0
      %v739 = vperm.slane %v736, 1
      %v774 = vunpack.c.l.b16 %v703
      %v775 = vunpack.c.h.b16 %v703
      %v776 = vunpack.c.l.b16 %v704
      %v777 = vunpack.c.h.b16 %v704
      %v778 = vunpack.c.l.b16 %v705
      %v779 = vunpack.c.h.b16 %v705
      %v780 = vunpack.c.l.b16 %v706
      %v781 = vunpack.c.h.b16 %v706
      %v782 = vunpack.c.l.b16 %v707
      %v783 = vunpack.c.h.b16 %v707
      %v784 = vunpack.c.l.b16 %v708
      %v785 = vunpack.c.h.b16 %v708
      %v786 = vunpack.c.l.b16 %v709
      %v787 = vunpack.c.h.b16 %v709
      %v788 = vunpack.c.l.b16 %v710
      %v789 = vunpack.c.h.b16 %v710
      %v790 = vunpack.c.l.b16 %v711
      %v791 = vunpack.c.h.b16 %v711
      %v792 = vunpack.c.l.b16 %v712
      %v793 = vunpack.c.h.b16 %v712
      %v794 = vunpack.c.l.b16 %v713
      %v795 = vunpack.c.h.b16 %v713
      %v796 = vunpack.c.l.b16 %v714
      %v797 = vunpack.c.h.b16 %v714
      %v798 = vunpack.c.l.b16 %v715
      %v799 = vunpack.c.h.b16 %v715
      %v800 = vunpack.c.l.b16 %v716
      %v801 = vunpack.c.h.b16 %v716
      %v802 = vunpack.c.l.b16 %v717
      %v803 = vunpack.c.h.b16 %v717
      %v804 = vunpack.c.l.b16 %v718
      %v805 = vunpack.c.h.b16 %v718
      %v806 = vunpack.c.l.b16 %v719
      %v807 = vunpack.c.h.b16 %v719
      %v808 = vunpack.c.l.b16 %v720
      %v809 = vunpack.c.h.b16 %v720
      %v810 = vunpack.c.l.b16 %v721
      %v811 = vunpack.c.h.b16 %v721
      %v812 = vunpack.c.l.b16 %v722
      %v813 = vunpack.c.h.b16 %v722
      %v814 = vunpack.c.l.b16 %v723
      %v815 = vunpack.c.h.b16 %v723
      %v816 = vunpack.c.l.b16 %v724
      %v817 = vunpack.c.h.b16 %v724
      %v818 = vunpack.c.l.b16 %v725
      %v819 = vunpack.c.h.b16 %v725
      %v820 = vunpack.c.l.b16 %v726
      %v821 = vunpack.c.h.b16 %v726
      %v822 = vunpack.c.l.b16 %v727
      %v823 = vunpack.c.h.b16 %v727
      %v824 = vunpack.c.l.b16 %v728
      %v825 = vunpack.c.h.b16 %v728
      %v826 = vunpack.c.l.b16 %v729
      %v827 = vunpack.c.h.b16 %v729
      %v828 = vunpack.c.l.b16 %v730
      %v829 = vunpack.c.h.b16 %v730
      %v830 = vunpack.c.l.b16 %v731
      %v831 = vunpack.c.h.b16 %v731
      %v832 = vunpack.c.l.b16 %v732
      %v833 = vunpack.c.h.b16 %v732
      %v834 = vunpack.c.l.b16 %v733
      %v835 = vunpack.c.h.b16 %v733
      %v836 = vunpack.c.l.b16 %v734
      %v837 = vunpack.c.h.b16 %v734
      %v838 = vpack.c.b16 %v776, %v774
      %v839 = vpack.c.b16 %v777, %v775
      %v840 = vpack.c.b16 %v780, %v778
      %v841 = vpack.c.b16 %v781, %v779
      %v842 = vpack.c.b16 %v784, %v782
      %v843 = vpack.c.b16 %v785, %v783
      %v844 = vpack.c.b16 %v788, %v786
      %v845 = vpack.c.b16 %v789, %v787
      %v846 = vpack.c.b16 %v792, %v790
      %v847 = vpack.c.b16 %v793, %v791
      %v848 = vpack.c.b16 %v796, %v794
      %v849 = vpack.c.b16 %v797, %v795
      %v850 = vpack.c.b16 %v800, %v798
      %v851 = vpack.c.b16 %v801, %v799
      %v852 = vpack.c.b16 %v804, %v802
      %v853 = vpack.c.b16 %v805, %v803
      %v854 = vpack.c.b16 %v808, %v806
      %v855 = vpack.c.b16 %v809, %v807
      %v856 = vpack.c.b16 %v812, %v810
      %v857 = vpack.c.b16 %v813, %v811
      %v858 = vpack.c.b16 %v816, %v814
      %v859 = vpack.c.b16 %v817, %v815
      %v860 = vpack.c.b16 %v820, %v818
      %v861 = vpack.c.b16 %v821, %v819
      %v862 = vpack.c.b16 %v824, %v822
      %v863 = vpack.c.b16 %v825, %v823
      %v864 = vpack.c.b16 %v828, %v826
      %v865 = vpack.c.b16 %v829, %v827
      %v866 = vpack.c.b16 %v832, %v830
      %v867 = vpack.c.b16 %v833, %v831
      %v868 = vpack.c.b16 %v836, %v834
      %v869 = vpack.c.b16 %v837, %v835
      %902 = vmatpush.bf16.msra.mxu0 %v852
      %903 = vmatpush.bf16.msra.mxu0 %v850
      %904 = vmatpush.bf16.msra.mxu0 %v848
      %905 = vmatpush.bf16.msra.mxu0 %v846
      %906 = vmatpush.bf16.msra.mxu0 %v844
      %907 = vmatpush.bf16.msra.mxu0 %v842
      %908 = vmatpush.bf16.msra.mxu0 %v840
      %909 = vmatpush.bf16.msra.mxu0 %v838
      %910 = vmatmul.bf16.gmra.mxu0 %v699
      %v911 = vpop.f32.mrf.mxu0
      %v912 = vadd.f32 %v738, %v911
      %v913 = vpop.f32.mrf.mxu0
      %914 = vdwg.mxu0
      %915 = vmatpush.bf16.msra.mxu0 %v868
      %916 = vmatpush.bf16.msra.mxu0 %v866
      %917 = vmatpush.bf16.msra.mxu0 %v864
      %918 = vmatpush.bf16.msra.mxu0 %v862
      %919 = vmatpush.bf16.msra.mxu0 %v860
      %920 = vmatpush.bf16.msra.mxu0 %v858
      %921 = vmatpush.bf16.msra.mxu0 %v856
      %922 = vmatpush.bf16.msra.mxu0 %v854
      %923 = vmatmul.bf16.gmra.mxu0 %v700
      %v924 = vpop.f32.mrf.mxu0
      %v925 = vadd.f32 %v912, %v924
      %v926 = vpop.f32.mrf.mxu0
      %927 = vdwg.mxu0
      %928 = vmatpush.bf16.msra.mxu0 %v853
      %929 = vmatpush.bf16.msra.mxu0 %v851
      %930 = vmatpush.bf16.msra.mxu0 %v849
      %931 = vmatpush.bf16.msra.mxu0 %v847
      %932 = vmatpush.bf16.msra.mxu0 %v845
      %933 = vmatpush.bf16.msra.mxu0 %v843
      %934 = vmatpush.bf16.msra.mxu0 %v841
      %935 = vmatpush.bf16.msra.mxu0 %v839
      %936 = vmatmul.bf16.gmra.mxu0 %v699
      %v937 = vpop.f32.mrf.mxu0
      %v938 = vadd.f32 %v739, %v937
      %v939 = vpop.f32.mrf.mxu0
      %940 = vdwg.mxu0
      %941 = vmatpush.bf16.msra.mxu0 %v869
      %942 = vmatpush.bf16.msra.mxu0 %v867
      %943 = vmatpush.bf16.msra.mxu0 %v865
      %944 = vmatpush.bf16.msra.mxu0 %v863
      %945 = vmatpush.bf16.msra.mxu0 %v861
      %946 = vmatpush.bf16.msra.mxu0 %v859
      %947 = vmatpush.bf16.msra.mxu0 %v857
      %948 = vmatpush.bf16.msra.mxu0 %v855
      %949 = vmatmul.bf16.gmra.mxu0 %v700
      %v950 = vpop.f32.mrf.mxu0
      %v951 = vadd.f32 %v938, %v950
      %v952 = vpop.f32.mrf.mxu0
      %953 = vdwg.mxu0
      %v954 = vmul.f32 %v925, 0.5
      %v955 = vmul.f32 %v951, 0.5
      %v956 = vtanh.pop %v954
      %v957 = vtanh.pop %v955
      %v958 = vmul.f32 %v956, 0.5
      %v959 = vmul.f32 %v957, 0.5
      %v960 = vadd.f32 %v958, 0.5
      %v961 = vadd.f32 %v959, 0.5
      %v962 = vmul.f32 %v925, %v960
      %v963 = vmul.f32 %v951, %v961
      %v964 = vpack.c.bf16 %v962, %v962
      %v965 = vpack.c.bf16 %v963, %v963
      %s966 = smul.addr %s108, 4
      %s967 = scalar_lea.vmem %s9, %s966
      %v968 = vld [vmem:[%s967] sm:$0xff]
      %s969 = scalar_lea.vmem %s10, %s104
      %v970 = vld [vmem:[%s969] sm:$0xff]
      %972 = vset.pattern.permute.xlu0 0
      %973 = vperm.xlu0 %972, %v970
      %v974 = vpop.permute.xlu0 %973
      %v977 = vunpack.c.l.b16 %v968
      %v978 = vunpack.c.h.b16 %v968
      %v979 = vpack.c.b16 %v977, %v977
      %v980 = vpack.c.b16 %v978, %v978
      %983 = vmatpush.bf16.xpose.msra.mxu0 0
      %984 = vmatpush.bf16.xpose.msra.mxu0 0
      %985 = vmatpush.bf16.xpose.msra.mxu0 0
      %986 = vmatpush.bf16.xpose.msra.mxu0 0
      %987 = vmatpush.bf16.xpose.msra.mxu0 0
      %988 = vmatpush.bf16.xpose.msra.mxu0 0
      %989 = vmatpush.bf16.xpose.msra.mxu0 0
      %990 = vmatpush.bf16.xpose.msra.mxu0 %v964
      %991 = vmatmul.bf16.gmra.mxu0 %v979
      %v992 = vpop.f32.mrf.mxu0
      %v993 = vadd.f32 %v974, %v992
      %v994 = vpop.f32.mrf.mxu0
      %995 = vdwg.mxu0
      %996 = vmatpush.bf16.xpose.msra.mxu0 0
      %997 = vmatpush.bf16.xpose.msra.mxu0 0
      %998 = vmatpush.bf16.xpose.msra.mxu0 0
      %999 = vmatpush.bf16.xpose.msra.mxu0 0
      %1000 = vmatpush.bf16.xpose.msra.mxu0 0
      %1001 = vmatpush.bf16.xpose.msra.mxu0 0
      %1002 = vmatpush.bf16.xpose.msra.mxu0 0
      %1003 = vmatpush.bf16.xpose.msra.mxu0 %v965
      %1004 = vmatmul.bf16.gmra.mxu0 %v980
      %v1005 = vpop.f32.mrf.mxu0
      %v1006 = vadd.f32 %v993, %v1005
      %v1007 = vpop.f32.mrf.mxu0
      %1008 = vdwg.mxu0
      %1010 = vset.pattern.permute.xlu0 0
      %1011 = vperm.xlu0 %1010, %v93
      %v1012 = vpop.permute.xlu0 %1011
      %v1014 = vsub.f32 %v1012, %v1006
      %v1015 = vmax.f32 %v1014, 0.0
      %v1016 = vand.u32 2147483647, %v1014
      %v1017 = vsub.f32 0.0, %v1016
      %v1018 = vmul.f32 %v1017, 1.442695
      %v1019 = vpow.pop %v1018
      %v1020 = vadd.f32 %v1019, 1.0
      %v1021 = vlog2.pop %v1020
      %v1022 = vmul.f32 %v1021, 0.6931472
      %v1023 = vadd.f32 %v1015, %v1022
      %v1024 = vsub.f32 %v1012, %v1023
      %1026 = vset.pattern.permute.xlu0 0
      %1027 = vperm.xlu0 %1026, %v94
      %v1028 = vpop.permute.xlu0 %1027
      %v1030 = vsub.f32 %v1024, %v1028
      %v1031 = vmax.f32 %v1030, 0.0
      %v1032 = vand.u32 2147483647, %v1030
      %v1033 = vsub.f32 0.0, %v1032
      %v1034 = vmul.f32 %v1033, 1.442695
      %v1035 = vpow.pop %v1034
      %v1036 = vadd.f32 %v1035, 1.0
      %v1037 = vlog2.pop %v1036
      %v1038 = vmul.f32 %v1037, 0.6931472
      %v1039 = vadd.f32 %v1031, %v1038
      %v1040 = vadd.f32 %v1028, %v1039
      %v1041 = vmul.f32 %v1040, 1.442695
      %v1042 = vpow.pop %v1041
      %v1043 = vsel %vm97, %v1006, %v1042
      %s1044 = scalar_lea.vmem [#allocation8], %s104
      %vm1045 = vcmask 64512
      %1046 = vst.msk [vmem:[%s1044] sm:$0xff] %vm1045, %v1043
    $region70: #{tpu_custom_call.1} parent=1 // loop_footer
      %s103 = sadd.s32 1, %s99
    $region71: #{tpu_custom_call.1} parent=1 // loop_footer_branch
      %98 = sbr.rel target = $region67
    $region72: #{tpu_custom_call.1} parent=1 // loop_exit
      _
    // Predicated region
    $region73: #{tpu_custom_call.1} parent=1 // pred_check
      _
    $region74: #{tpu_custom_call.1} parent=1 // pred_check_branch
      %1048 = sbr.rel (0) target = $region76
    $region75: #{tpu_custom_call.1} parent=1 // pred_region
      %1050 = vsyncadd [#allocation4], 0
      %s1051 = sshll.u32 [#allocation8], 4
      %s1052 = int_to_ptr.vmem [resolvable:$true] %s1051
      %s1053 = sshll.u32 %s13, 4
      %s1054 = int_to_ptr.hbm [resolvable:$true] %s1053
      %1059 = dma.vmem_to_hbm [thread:$0]  %s1052, 640, %s1054, [#allocation4], 128, 128, 8
    $region76: #{tpu_custom_call.1} parent=1 // pred_fallthru
      _
    // Predicated region
    $region77: #{tpu_custom_call.1} parent=1 // pred_check
      _
    $region78: #{tpu_custom_call.1} parent=1 // pred_check_branch
      %1061 = sbr.rel (0) target = $region80
    $region79: #{tpu_custom_call.1} parent=1 // pred_region
      %1063 = dma.done [#allocation4], 640
    $region80: #{tpu_custom_call.1} parent=1 // pred_fallthru
      _
    %1064 = vsyncpa [#allocation3], 1
    %1065 = vsyncpa [#allocation6], 1
    %1066 = vsyncpa [#allocation4], 1

</llo_original>
